<compile_context>
chip_gen: v7x
topology: tpu7x:2x2x1
jax: 0.10.0
libtpu: 0.0.40
codegen_flags: <defaults>
</compile_context>

<pallas_src>
import jax
import jax.numpy as jnp
from jax.experimental import pallas as pl
from jax.experimental.pallas import tpu as pltpu
from functools import partial


def _channorm_kernel(x_ref, g_ref, b_ref, o_ref, *, eps, inv_c):
    # x_ref/o_ref: (NB, C, TILE)    g_ref/b_ref: (1, C, 1)
    x = x_ref[...].astype(jnp.float32)
    g = g_ref[...].astype(jnp.float32)
    b = b_ref[...].astype(jnp.float32)

    # Two-pass mean / variance (matches torch.var(..., unbiased=False) exactly
    # and avoids the E[x^2]-E[x]^2 cancellation issue).
    mean = jnp.sum(x, axis=1, keepdims=True) * inv_c          # (NB, 1, TILE)
    xc = x - mean                                             # (NB, C, TILE)
    var = jnp.sum(xc * xc, axis=1, keepdims=True) * inv_c     # (NB, 1, TILE)
    std = jnp.sqrt(var)

    # One exact reciprocal per lane column (EUP); only VPU muls on the block.
    r = pl.reciprocal(std + eps, approx=False)                # (NB, 1, TILE)

    o_ref[...] = (xc * (r * g) + b).astype(o_ref.dtype)


def _vmem_capacity_bytes():
    """Generation-aware VMEM capacity; conservative fallback (v7x per-TC)."""
    try:
        return int(pltpu.get_tpu_info().vmem_capacity_bytes)
    except Exception:
        return 64 << 20


def _pick_tiling(N, C, T, itemsize, *, target_block_bytes, vmem_budget):
    """Choose (nb, tile): batch rows per block and lane-tile size.

    VMEM accounting per lane-column per batch row:
      2 x (in + out) double-buffered I/O buffers  +  ~3 full f32 temporaries
      (x upcast / centered x, its square, and the output before downcast).
    """
    per_lane = C * (4 * itemsize + 3 * 4)

    # ---- lane tile ----
    if T <= 128:
        tile = T                                   # full lane dim is legal
    else:
        t_pad = ((T + 127) // 128) * 128
        cap = min(target_block_bytes // (C * itemsize),
                  vmem_budget // per_lane,
                  t_pad)
        cap = max(128, (cap // 128) * 128)
        tile = cap
        # Prefer a tile that divides T (no masked tail step), as long as it
        # keeps the block at least half the target size.
        if T % 128 == 0 and T % tile != 0:
            for k in range(cap // 128, 0, -1):
                cand = k * 128
                if T % cand == 0:
                    if cand * 2 >= cap:
                        tile = cand
                    break

    # ---- batch rows per block (amortize per-step overhead when T is small) ----
    nb = 1
    if N > 1:
        per_batch_io = max(C * tile * itemsize, 1)
        per_batch_ws = max(tile * per_lane, 1)
        cap_nb = min(N,
                     max(1, target_block_bytes // per_batch_io),
                     max(1, vmem_budget // per_batch_ws))
        for d in range(int(cap_nb), 0, -1):        # largest divisor of N
            if N % d == 0:
                nb = d
                break
    return nb, tile


def chan_norm(x, g, b, eps=1e-5, tile=None, nb=None):
    """x: (N, C, D, H, W); g, b: (1, C, 1, 1, 1). Matches torch ChanNorm.forward."""
    N, C, D, H, W = x.shape
    T = D * H * W

    x3 = x.reshape(N, C, T)      # contiguous — free, no HBM transpose
    g3 = g.reshape(1, C, 1)
    b3 = b.reshape(1, C, 1)

    itemsize = x.dtype.itemsize
    vmem_cap = _vmem_capacity_bytes()
    vmem_budget = vmem_cap // 2                            # 32 MiB v7x, 64 MiB v5e/v6e
    target_block = (4 << 20) if vmem_cap >= (96 << 20) else (2 << 20)

    auto_nb, auto_tile = _pick_tiling(
        N, C, T, itemsize,
        target_block_bytes=target_block, vmem_budget=vmem_budget)
    if tile is None:
        tile = auto_tile
    if nb is None:
        nb = auto_nb
    assert N % nb == 0, "nb must divide N"

    grid = (N // nb, pl.cdiv(T, tile))

    # Scoped-VMEM limit derived from the actual working set (+ margin) so the
    # larger blocks keep double-buffering alive instead of OOM/serializing.
    elems = nb * C * tile
    working = 4 * elems * itemsize + 3 * elems * 4
    vmem_limit = int(min(max(working + (8 << 20), 24 << 20),
                         vmem_cap - (8 << 20)))

    out = pl.pallas_call(
        partial(_channorm_kernel, eps=eps, inv_c=1.0 / C),
        out_shape=jax.ShapeDtypeStruct((N, C, T), x.dtype),
        grid_spec=pltpu.PrefetchScalarGridSpec(
            num_scalar_prefetch=0,
            grid=grid,
            in_specs=[
                pl.BlockSpec((nb, C, tile), lambda n, i: (n, 0, i)),
                pl.BlockSpec((1, C, 1), lambda n, i: (0, 0, 0)),
                pl.BlockSpec((1, C, 1), lambda n, i: (0, 0, 0)),
            ],
            out_specs=pl.BlockSpec((nb, C, tile), lambda n, i: (n, 0, i)),
        ),
        compiler_params=pltpu.CompilerParams(
            dimension_semantics=("parallel", "parallel"),   # megacore-shardable
            vmem_limit_bytes=vmem_limit,
        ),
    )(x3, g3, b3)

    return out.reshape(N, C, D, H, W)


def chan_norm_ref(x, g, b, eps=1e-5):
    # pure-JAX reference mirroring the torch module exactly (unbiased=False)
    mean = jnp.mean(x, axis=1, keepdims=True)
    var = jnp.mean((x - mean) ** 2, axis=1, keepdims=True)
    std = jnp.sqrt(var)
    return (x - mean) / (std + eps) * g + b


if __name__ == "__main__":
    key = jax.random.PRNGKey(0)
    k1, k2, k3 = jax.random.split(key, 3)

    # --- case 1: module-default parameters (ones / zeros), small NCDHW ---
    N, C, D, H, W = 2, 4, 4, 8, 8
    x = jax.random.normal(k1, (N, C, D, H, W), dtype=jnp.float32)
    g = jnp.ones((1, C, 1, 1, 1), dtype=jnp.float32)
    b = jnp.zeros((1, C, 1, 1, 1), dtype=jnp.float32)
    y = jax.block_until_ready(chan_norm(x, g, b))
    assert y.shape == x.shape
    assert jnp.allclose(y, chan_norm_ref(x, g, b), atol=1e-5, rtol=1e-5)

    # --- case 2: non-trivial affine parameters ---
    g2 = 1.0 + 0.1 * jax.random.normal(k2, (1, C, 1, 1, 1), dtype=jnp.float32)
    b2 = 0.1 * jax.random.normal(k3, (1, C, 1, 1, 1), dtype=jnp.float32)
    y2 = jax.block_until_ready(chan_norm(x, g2, b2))
    assert jnp.allclose(y2, chan_norm_ref(x, g2, b2), atol=1e-5, rtol=1e-5)

    # --- case 3: tiny spatial extent (T < 128, full-lane block path) ---
    x3 = jax.random.normal(k1, (1, 6, 3, 5, 7), dtype=jnp.float32)
    g3 = jnp.ones((1, 6, 1, 1, 1), dtype=jnp.float32)
    b3 = jnp.zeros((1, 6, 1, 1, 1), dtype=jnp.float32)
    y3 = jax.block_until_ready(chan_norm(x3, g3, b3))
    assert jnp.allclose(y3, chan_norm_ref(x3, g3, b3), atol=1e-5, rtol=1e-5)

    # --- case 4: forced multi-step grid with nb>1 (exercise batch blocking) ---
    y4 = jax.block_until_ready(chan_norm(x, g2, b2, tile=128, nb=2))
    assert jnp.allclose(y4, chan_norm_ref(x, g2, b2), atol=1e-5, rtol=1e-5)

    # --- case 5: masked tail block (T not a multiple of the tile) ---
    x5 = jax.random.normal(k2, (2, 4, 4, 8, 12), dtype=jnp.float32)   # T = 384
    y5 = jax.block_until_ready(chan_norm(x5, g2, b2, tile=256, nb=1))
    assert jnp.allclose(y5, chan_norm_ref(x5, g2, b2), atol=1e-5, rtol=1e-5)

    print("KERNEL_OK")
</pallas_src>

<mosaic_0001>
module attributes {stable_mosaic.version = 11 : i64} {
  func.func @_channorm_kernel(%arg0: i32, %arg1: i32, %arg2: memref<2x4x256xf32, #tpu.memory_space<vmem>>, %arg3: memref<1x4x1xf32, #tpu.memory_space<vmem>>, %arg4: memref<1x4x1xf32, #tpu.memory_space<vmem>>, %arg5: memref<2x4x256xf32, #tpu.memory_space<vmem>>) attributes {dimension_semantics = [#tpu.dimension_semantics<parallel>, #tpu.dimension_semantics<parallel>], iteration_bounds = array<i64: 1, 1>, scalar_prefetch = 0 : i64, scratch_operands = 0 : i64, tpu.core_type = #tpu.core_type<tc>, window_params = [{transform_indices = @transform_0, window_bounds = array<i64: 2, 4, 256>}, {pipeline_mode = #tpu.pipeline_mode<synchronous>, transform_indices = @transform_1, window_bounds = array<i64: 1, 4, 1>}, {pipeline_mode = #tpu.pipeline_mode<synchronous>, transform_indices = @transform_2, window_bounds = array<i64: 1, 4, 1>}, {transform_indices = @transform_3, window_bounds = array<i64: 2, 4, 256>}]} {
    %c0 = arith.constant 0 : index
    %c0_0 = arith.constant 0 : index
    %c0_1 = arith.constant 0 : index
    %0 = vector.load %arg2[%c0, %c0_0, %c0_1] : memref<2x4x256xf32, #tpu.memory_space<vmem>>, vector<2x4x256xf32>
    %c0_2 = arith.constant 0 : index
    %c0_3 = arith.constant 0 : index
    %c0_4 = arith.constant 0 : index
    %1 = vector.load %arg3[%c0_2, %c0_3, %c0_4] : memref<1x4x1xf32, #tpu.memory_space<vmem>>, vector<1x4x1xf32>
    %c0_5 = arith.constant 0 : index
    %c0_6 = arith.constant 0 : index
    %c0_7 = arith.constant 0 : index
    %2 = vector.load %arg4[%c0_5, %c0_6, %c0_7] : memref<1x4x1xf32, #tpu.memory_space<vmem>>, vector<1x4x1xf32>
    %cst = arith.constant dense<0.000000e+00> : vector<2x256xf32>
    %3 = vector.multi_reduction <add>, %0, %cst [1] : vector<2x4x256xf32> to vector<2x256xf32>
    %4 = vector.shape_cast %3 : vector<2x256xf32> to vector<2x1x256xf32>
    %cst_8 = arith.constant 2.500000e-01 : f32
    %5 = vector.broadcast %cst_8 : f32 to vector<2x1x256xf32>
    %6 = arith.mulf %4, %5 : vector<2x1x256xf32>
    %7 = vector.broadcast %6 : vector<2x1x256xf32> to vector<2x4x256xf32>
    %8 = arith.subf %0, %7 : vector<2x4x256xf32>
    %9 = arith.mulf %8, %8 : vector<2x4x256xf32>
    %cst_9 = arith.constant dense<0.000000e+00> : vector<2x256xf32>
    %10 = vector.multi_reduction <add>, %9, %cst_9 [1] : vector<2x4x256xf32> to vector<2x256xf32>
    %11 = vector.shape_cast %10 : vector<2x256xf32> to vector<2x1x256xf32>
    %cst_10 = arith.constant 2.500000e-01 : f32
    %12 = vector.broadcast %cst_10 : f32 to vector<2x1x256xf32>
    %13 = arith.mulf %11, %12 : vector<2x1x256xf32>
    %14 = math.sqrt %13 : vector<2x1x256xf32>
    %cst_11 = arith.constant 9.99999974E-6 : f32
    %15 = vector.broadcast %cst_11 : f32 to vector<2x1x256xf32>
    %16 = arith.addf %14, %15 : vector<2x1x256xf32>
    %17 = tpu.reciprocal %16 : vector<2x1x256xf32> -> vector<2x1x256xf32>
    %18 = vector.broadcast %17 : vector<2x1x256xf32> to vector<2x4x256xf32>
    %19 = vector.broadcast %1 : vector<1x4x1xf32> to vector<2x4x256xf32>
    %20 = arith.mulf %18, %19 : vector<2x4x256xf32>
    %21 = arith.mulf %8, %20 : vector<2x4x256xf32>
    %22 = vector.broadcast %2 : vector<1x4x1xf32> to vector<2x4x256xf32>
    %23 = arith.addf %21, %22 : vector<2x4x256xf32>
    %c0_12 = arith.constant 0 : index
    %c0_13 = arith.constant 0 : index
    %c0_14 = arith.constant 0 : index
    %24 = vector.load %arg5[%c0_12, %c0_13, %c0_14] : memref<2x4x256xf32, #tpu.memory_space<vmem>>, vector<2x4x256xf32>
    tpu.vector_store %arg5[%c0_12, %c0_13, %c0_14], %23 {strides = array<i32>} : memref<2x4x256xf32, #tpu.memory_space<vmem>>, vector<2x4x256xf32>,
    return
  }
  func.func @transform_0(%arg0: i32, %arg1: i32) -> (i32, i32, i32) {
    %c0_i32 = arith.constant 0 : i32
    %c0_i32_0 = arith.constant 0 : i32
    return %arg0, %c0_i32, %arg1 : i32, i32, i32
  }
  func.func @transform_1(%arg0: i32, %arg1: i32) -> (i32, i32, i32) {
    %c0_i32 = arith.constant 0 : i32
    %c0_i32_0 = arith.constant 0 : i32
    %c0_i32_1 = arith.constant 0 : i32
    %c0_i32_2 = arith.constant 0 : i32
    return %c0_i32, %c0_i32_0, %c0_i32_1 : i32, i32, i32
  }
  func.func @transform_2(%arg0: i32, %arg1: i32) -> (i32, i32, i32) {
    %c0_i32 = arith.constant 0 : i32
    %c0_i32_0 = arith.constant 0 : i32
    %c0_i32_1 = arith.constant 0 : i32
    %c0_i32_2 = arith.constant 0 : i32
    return %c0_i32, %c0_i32_0, %c0_i32_1 : i32, i32, i32
  }
  func.func @transform_3(%arg0: i32, %arg1: i32) -> (i32, i32, i32) {
    %c0_i32 = arith.constant 0 : i32
    %c0_i32_0 = arith.constant 0 : i32
    return %arg0, %c0_i32, %arg1 : i32, i32, i32
  }
}

</mosaic_0001>

<llo_original>
// kernel: tpu_custom_call.1
$region0: #{tpu_custom_call.1}
  #allocation0 [shape = 'u32[]', space=smem, size = 0x4, offset = 0x4, fixed_abs, tag = 'smem constant byte address 0x4 - core index']
  #allocation1 [shape = 'u32[144,128]{1,0:T(1,128)}', space=vmem, size = 0x12000, scoped, tag = 'internal scratch']
  %s0 = inlined_call_operand.hbm [shape: f32[2,4,256], index: 0, kind: input, shape index: {}]
  %s1 = inlined_call_operand.vmem [shape: f32[1,4,1], index: 1, kind: input, shape index: {}]
  %s2 = inlined_call_operand.vmem [shape: f32[1,4,1], index: 2, kind: input, shape index: {}]
  %s3 = inlined_call_operand.hbm [shape: f32[2,4,256], index: 3, kind: output, shape index: {}]
  %s4 = sld [smem:[#allocation0]]
  $region26: #{tpu_custom_call.1} parent=0
    _
  %s6 = ssub.s32 1, %s4
  %s7 = scalar_select 0, %s6, %s4
  $region1: #{tpu_custom_call.1} parent=0
    #allocation2 [shape = 'u8[8192]{0}', space=vmem, size = 0x2000, scoped, tag = 'input window, operand 0, single buffered']
    #allocation3 [shape = 's32[1]{0}', space=sflag, size = 0x4, scoped, tag = 'scoped memory for tpu_custom_call.1']
    #allocation4 [shape = 's32[1]{0}', space=sflag, size = 0x4, scoped, tag = 'scoped memory for tpu_custom_call.1']
    #allocation5 [shape = 'u8[8192]{0}', space=vmem, size = 0x2000, scoped, tag = 'output window, operand 0, single buffered']
    %8 = vsyncpa [#allocation3], 0
    %9 = vsyncpa [#allocation4], 0
    // Predicated region
    $region2: #{tpu_custom_call.1} parent=1 // pred_check
      _
    $region3: #{tpu_custom_call.1} parent=1 // pred_check_branch
      %11 = sbr.rel (0) target = $region5
    $region4: #{tpu_custom_call.1} parent=1 // pred_region
      %s13 = ssub.s32 256, 256
      %14 = vsyncadd [#allocation3], %s13
      %s15 = sshll.u32 [#allocation2], 4
      %s16 = int_to_ptr.vmem [resolvable:$true] %s15
      %21 = dma.hbm_to_vmem [thread:$0]  %s0, 256, %s16, [#allocation3], 128, 128, 8
    $region5: #{tpu_custom_call.1} parent=1 // pred_fallthru
      _
    // Predicated region
    $region6: #{tpu_custom_call.1} parent=1 // pred_check
      _
    $region7: #{tpu_custom_call.1} parent=1 // pred_check_branch
      %23 = sbr.rel (0) target = $region9
    $region8: #{tpu_custom_call.1} parent=1 // pred_region
      _
    $region9: #{tpu_custom_call.1} parent=1 // pred_fallthru
      _
    // Predicated region
    $region10: #{tpu_custom_call.1} parent=1 // pred_check
      _
    $region11: #{tpu_custom_call.1} parent=1 // pred_check_branch
      %25 = sbr.rel (0) target = $region13
    $region12: #{tpu_custom_call.1} parent=1 // pred_region
      _
    $region13: #{tpu_custom_call.1} parent=1 // pred_fallthru
      _
    // Predicated region
    $region14: #{tpu_custom_call.1} parent=1 // pred_check
      _
    $region15: #{tpu_custom_call.1} parent=1 // pred_check_branch
      %27 = sbr.rel (0) target = $region17
    $region16: #{tpu_custom_call.1} parent=1 // pred_region
      %28 = dma.done [#allocation3], 256
    $region17: #{tpu_custom_call.1} parent=1 // pred_fallthru
      _
    %v29 = vld [vmem:[#allocation2] sm:$0xff]
    %v30 = vld [vmem:[#allocation2 + $0x8] sm:$0xff]
    %v31 = vld [vmem:[%s1] sm:$0xf]
    %v32 = vld [vmem:[%s2] sm:$0xf]
    %v35 = vcombine.high %v29, %v29
    %v36 = vcombine.high %v30, %v30
    %vm39 = vcmask 1043456
    %v40 = vsel %vm39, %v29, 0.0
    %v41 = vrot.slane %v40, 4
    %v42 = vadd.f32 %v40, %v41
    %v43 = vrot.slane %v42, 2
    %v44 = vadd.f32 %v42, %v43
    %v45 = vrot.slane %v44, 1
    %v46 = vadd.f32 %v44, %v45
    %v47 = vsel %vm39, %v35, 0.0
    %v48 = vrot.slane %v47, 4
    %v49 = vadd.f32 %v47, %v48
    %v50 = vrot.slane %v49, 2
    %v51 = vadd.f32 %v49, %v50
    %v52 = vrot.slane %v51, 1
    %v53 = vadd.f32 %v51, %v52
    %v54 = vsel %vm39, %v30, 0.0
    %v55 = vrot.slane %v54, 4
    %v56 = vadd.f32 %v54, %v55
    %v57 = vrot.slane %v56, 2
    %v58 = vadd.f32 %v56, %v57
    %v59 = vrot.slane %v58, 1
    %v60 = vadd.f32 %v58, %v59
    %v61 = vsel %vm39, %v36, 0.0
    %v62 = vrot.slane %v61, 4
    %v63 = vadd.f32 %v61, %v62
    %v64 = vrot.slane %v63, 2
    %v65 = vadd.f32 %v63, %v64
    %v66 = vrot.slane %v65, 1
    %v67 = vadd.f32 %v65, %v66
    %v68 = vmul.f32 %v46, 0.25
    %v69 = vmul.f32 %v53, 0.25
    %v70 = vmul.f32 %v60, 0.25
    %v71 = vmul.f32 %v67, 0.25
    %v76 = vcombine.low %v68, %v69
    %v77 = vcombine.low %v70, %v71
    %v80 = vsub.f32 %v29, %v76
    %v81 = vsub.f32 %v30, %v77
    %v82 = vmul.f32 %v80, %v80
    %v83 = vmul.f32 %v81, %v81
    %v86 = vcombine.high %v82, %v82
    %v87 = vcombine.high %v83, %v83
    %v90 = vsel %vm39, %v82, 0.0
    %v91 = vrot.slane %v90, 4
    %v92 = vadd.f32 %v90, %v91
    %v93 = vrot.slane %v92, 2
    %v94 = vadd.f32 %v92, %v93
    %v95 = vrot.slane %v94, 1
    %v96 = vadd.f32 %v94, %v95
    %v97 = vsel %vm39, %v86, 0.0
    %v98 = vrot.slane %v97, 4
    %v99 = vadd.f32 %v97, %v98
    %v100 = vrot.slane %v99, 2
    %v101 = vadd.f32 %v99, %v100
    %v102 = vrot.slane %v101, 1
    %v103 = vadd.f32 %v101, %v102
    %v104 = vsel %vm39, %v83, 0.0
    %v105 = vrot.slane %v104, 4
    %v106 = vadd.f32 %v104, %v105
    %v107 = vrot.slane %v106, 2
    %v108 = vadd.f32 %v106, %v107
    %v109 = vrot.slane %v108, 1
    %v110 = vadd.f32 %v108, %v109
    %v111 = vsel %vm39, %v87, 0.0
    %v112 = vrot.slane %v111, 4
    %v113 = vadd.f32 %v111, %v112
    %v114 = vrot.slane %v113, 2
    %v115 = vadd.f32 %v113, %v114
    %v116 = vrot.slane %v115, 1
    %v117 = vadd.f32 %v115, %v116
    %v118 = vmul.f32 %v96, 0.25
    %v119 = vmul.f32 %v103, 0.25
    %v120 = vmul.f32 %v110, 0.25
    %v121 = vmul.f32 %v117, 0.25
    %v122 = vrsqrt.pop %v118
    %v123 = vmul.f32 %v118, %v122
    %vm124 = vcmp.eq.f32.partialorder %v118, inf
    %v125 = vsel %vm124, %v118, %v123
    %vm126 = vcmp.eq.f32.partialorder %v118, 0.0
    %v127 = vand.u32 %v118, 2147483648
    %v128 = vsel %vm126, %v127, %v125
    %v129 = vrsqrt.pop %v119
    %v130 = vmul.f32 %v119, %v129
    %vm131 = vcmp.eq.f32.partialorder %v119, inf
    %v132 = vsel %vm131, %v119, %v130
    %vm133 = vcmp.eq.f32.partialorder %v119, 0.0
    %v134 = vand.u32 %v119, 2147483648
    %v135 = vsel %vm133, %v134, %v132
    %v136 = vrsqrt.pop %v120
    %v137 = vmul.f32 %v120, %v136
    %vm138 = vcmp.eq.f32.partialorder %v120, inf
    %v139 = vsel %vm138, %v120, %v137
    %vm140 = vcmp.eq.f32.partialorder %v120, 0.0
    %v141 = vand.u32 %v120, 2147483648
    %v142 = vsel %vm140, %v141, %v139
    %v143 = vrsqrt.pop %v121
    %v144 = vmul.f32 %v121, %v143
    %vm145 = vcmp.eq.f32.partialorder %v121, inf
    %v146 = vsel %vm145, %v121, %v144
    %vm147 = vcmp.eq.f32.partialorder %v121, 0.0
    %v148 = vand.u32 %v121, 2147483648
    %v149 = vsel %vm147, %v148, %v146
    %v150 = vadd.f32 %v128, 1e-05
    %v151 = vadd.f32 %v135, 1e-05
    %v152 = vadd.f32 %v142, 1e-05
    %v153 = vadd.f32 %v149, 1e-05
    %v154 = vrcp.pop %v150
    %v155 = vrcp.pop %v151
    %v156 = vrcp.pop %v152
    %v157 = vrcp.pop %v153
    %159 = vset.pattern.permute.xlu0 0
    %160 = vperm.xlu0 %159, %v31
    %v161 = vpop.permute.xlu0 %160
    %v163 = vmul.f32 %v154, %v161
    %v164 = vmul.f32 %v155, %v161
    %v165 = vmul.f32 %v156, %v161
    %v166 = vmul.f32 %v157, %v161
    %v171 = vcombine.low %v163, %v164
    %v172 = vcombine.low %v165, %v166
    %v175 = vmul.f32 %v80, %v171
    %v176 = vmul.f32 %v81, %v172
    %178 = vset.pattern.permute.xlu0 0
    %179 = vperm.xlu0 %178, %v32
    %v180 = vpop.permute.xlu0 %179
    %v182 = vunpack.c.l.s4 839922192
    %v183 = vunpack.c.0.s8 %v182
    %v184 = vlaneseq
    %v185 = vshrl.u32 %v184, 7
    %v186 = vsub.s32 %v183, %v185
    %v187 = vrot.slane %v180, %v186
    %v189 = vadd.f32 %v175, %v187
    %v190 = vadd.f32 %v176, %v187
    %191 = vst [vmem:[#allocation5] sm:$0xff] %v189
    %192 = vst [vmem:[#allocation5 + $0x8] sm:$0xff] %v190
    // Predicated region
    $region18: #{tpu_custom_call.1} parent=1 // pred_check
      _
    $region19: #{tpu_custom_call.1} parent=1 // pred_check_branch
      %194 = sbr.rel (0) target = $region21
    $region20: #{tpu_custom_call.1} parent=1 // pred_region
      %s196 = ssub.s32 256, 256
      %197 = vsyncadd [#allocation4], %s196
      %s198 = sshll.u32 [#allocation5], 4
      %s199 = int_to_ptr.vmem [resolvable:$true] %s198
      %204 = dma.vmem_to_hbm [thread:$0]  %s199, 256, %s3, [#allocation4], 128, 128, 8
    $region21: #{tpu_custom_call.1} parent=1 // pred_fallthru
      _
    // Predicated region
    $region22: #{tpu_custom_call.1} parent=1 // pred_check
      _
    $region23: #{tpu_custom_call.1} parent=1 // pred_check_branch
      %206 = sbr.rel (0) target = $region25
    $region24: #{tpu_custom_call.1} parent=1 // pred_region
      %207 = dma.done [#allocation4], 256
    $region25: #{tpu_custom_call.1} parent=1 // pred_fallthru
      _
    %208 = vsyncpa [#allocation3], 1
    %209 = vsyncpa [#allocation4], 1

</llo_original>
